<compile_context>
chip_gen: v7x
topology: tpu7x:2x2x1
jax: 0.10.0
libtpu: 0.0.40
codegen_flags: <defaults>
</compile_context>

<pallas_src>
import jax
import jax.numpy as jnp
from jax import lax
from jax.experimental import pallas as pl
from jax.experimental.pallas import tpu as pltpu


def _feature_extractor_kernel(x_ref, w1_ref, w2_ref, w3_ref, o_ref):
    # x_ref: (tm, n) row tile in natural layout.
    # Contract on n for BOTH operands so the result is (12, tm) with the batch
    # on the 128-lane axis — no wrapper transpose, no masked partial stores.
    h = jnp.tanh(lax.dot_general(
        w1_ref[...], x_ref[...],
        dimension_numbers=(((1,), (1,)), ((), ())),
        preferred_element_type=jnp.float32))
    h = h * lax.rsqrt(jnp.sum(h * h, axis=0, keepdims=True))

    # --- layer 2 (6, tm)
    h = jnp.tanh(jnp.dot(w2_ref[...], h, preferred_element_type=jnp.float32))
    h = h * lax.rsqrt(jnp.sum(h * h, axis=0, keepdims=True))

    # --- layer 3 (3, tm)
    h = jnp.tanh(jnp.dot(w3_ref[...], h, preferred_element_type=jnp.float32))
    h = h * lax.rsqrt(jnp.sum(h * h, axis=0, keepdims=True))

    # NOTE: like the PyTorch module, an all-zero row yields 0 * inf = NaN
    # (no epsilon), preserving the reference semantics exactly.
    # TODO(synk): if EUP (tanh) becomes the critical unit on v7x, consider
    # bf16 tanh for layers 2/3 (not applicable on v5e; re-validate tolerance).
    o_ref[...] = h.astype(o_ref.dtype)


def _round_up(v, m):
    return ((v + m - 1) // m) * m


def feature_extractor(x, w1, w2, w3, *, tm_max=32768):
    """x: any shape reshapable to (-1, n). Weights are (out, in) like nn.Linear.
    Returns (B, 3) float32."""
    n = w1.shape[1]
    x2d = x.reshape(-1, n)            # natural (B, n) layout — no transpose
    B = x2d.shape[0]

    # Lane-dense row tile: multiple of 128; sized so the grid has >= 2 steps
    # whenever B > 128 (keeps both v7x TensorCores busy), capped at tm_max
    # (~2 MiB of x per step) to amortize the fixed per-step overhead.
    tm = min(tm_max, max(128, _round_up(pl.cdiv(B, 2), 128)))
    grid = (pl.cdiv(B, tm),)          # ragged last block handled by Pallas

    out_t = pl.pallas_call(
        _feature_extractor_kernel,
        out_shape=jax.ShapeDtypeStruct((3, B), jnp.float32),
        grid_spec=pltpu.PrefetchScalarGridSpec(
            num_scalar_prefetch=0,
            grid=grid,
            in_specs=[
                # (tm, n) row tile of x, natural layout; last dim == full n.
                pl.BlockSpec((tm, n), lambda i: (i, 0)),
                # Tiny constant-index weights: DMA'd once, VMEM-resident.
                pl.BlockSpec((12, n), lambda i: (0, 0)),
                pl.BlockSpec((6, 12), lambda i: (0, 0)),
                pl.BlockSpec((3, 6), lambda i: (0, 0)),
            ],
            # Lane-dense output: batch on the 128-lane axis, unmasked vst.
            out_specs=pl.BlockSpec((3, tm), lambda i: (0, i)),
        ),
        compiler_params=pltpu.CompilerParams(
            dimension_semantics=("parallel",),  # row tiles shard across TCs
        ),
    )(x2d, w1, w2, w3)

    # Tiny (12 B/row) transpose to match the nn.Module's (B, 3) output layout.
    return out_t.T


def init_params(n, key):
    """nn.Linear default init U(-1/sqrt(fan_in), 1/sqrt(fan_in)); weights stored
    (out_features, in_features) exactly like PyTorch."""
    k1, k2, k3 = jax.random.split(key, 3)
    w1 = jax.random.uniform(k1, (12, n), jnp.float32, -1.0, 1.0) / jnp.sqrt(float(n))
    w2 = jax.random.uniform(k2, (6, 12), jnp.float32, -1.0, 1.0) / jnp.sqrt(12.0)
    w3 = jax.random.uniform(k3, (3, 6), jnp.float32, -1.0, 1.0) / jnp.sqrt(6.0)
    return w1, w2, w3


def _reference(x, w1, w2, w3):
    n = w1.shape[1]
    h = x.reshape(-1, n).astype(jnp.float32)
    h = jnp.tanh(h @ w1.T)
    h = h / jnp.linalg.norm(h, axis=1, keepdims=True)
    h = jnp.tanh(h @ w2.T)
    h = h / jnp.linalg.norm(h, axis=1, keepdims=True)
    h = jnp.tanh(h @ w3.T)
    h = h / jnp.linalg.norm(h, axis=1, keepdims=True)
    return h


if __name__ == "__main__":
    n = 16
    key = jax.random.PRNGKey(0)
    kx, kp = jax.random.split(key)

    # small input: (2, 16, 16) -> view(-1, n) gives 32 rows of dim 16
    # (B=32 also exercises the ragged / non-dividing last-block path, tm=128)
    x = jax.random.normal(kx, (2, 16, n), dtype=jnp.float32)
    w1, w2, w3 = init_params(n, kp)

    out = feature_extractor(x, w1, w2, w3)
    out = jax.block_until_ready(out)

    ref = _reference(x, w1, w2, w3)
    assert out.shape == (32, 3)
    assert jnp.allclose(out, ref, atol=1e-5, rtol=1e-4), "mismatch vs reference"

    print("KERNEL_OK")
</pallas_src>

<mosaic_0001>
module attributes {stable_mosaic.version = 11 : i64} {
  func.func @_feature_extractor_kernel(%arg0: i32, %arg1: memref<128x16xf32, #tpu.memory_space<vmem>>, %arg2: memref<12x16xf32, #tpu.memory_space<vmem>>, %arg3: memref<6x12xf32, #tpu.memory_space<vmem>>, %arg4: memref<3x6xf32, #tpu.memory_space<vmem>>, %arg5: memref<3x128xf32, #tpu.memory_space<vmem>>) attributes {dimension_semantics = [#tpu.dimension_semantics<parallel>], iteration_bounds = array<i64: 1>, scalar_prefetch = 0 : i64, scratch_operands = 0 : i64, tpu.core_type = #tpu.core_type<tc>, window_params = [{transform_indices = @transform_0, window_bounds = array<i64: 128, 16>}, {pipeline_mode = #tpu.pipeline_mode<synchronous>, transform_indices = @transform_1, window_bounds = array<i64: 12, 16>}, {pipeline_mode = #tpu.pipeline_mode<synchronous>, transform_indices = @transform_2, window_bounds = array<i64: 6, 12>}, {pipeline_mode = #tpu.pipeline_mode<synchronous>, transform_indices = @transform_3, window_bounds = array<i64: 3, 6>}, {transform_indices = @transform_4, window_bounds = array<i64: 3, 128>}]} {
    %c0 = arith.constant 0 : index
    %c0_0 = arith.constant 0 : index
    %0 = vector.load %arg2[%c0, %c0_0] : memref<12x16xf32, #tpu.memory_space<vmem>>, vector<12x16xf32>
    %c0_1 = arith.constant 0 : index
    %c0_2 = arith.constant 0 : index
    %1 = vector.load %arg1[%c0_1, %c0_2] : memref<128x16xf32, #tpu.memory_space<vmem>>, vector<128x16xf32>
    %cst = arith.constant dense<0.000000e+00> : vector<12x128xf32>
    %2 = tpu.matmul %0, %1, %cst {dimension_numbers = #tpu.dot_dimension_numbers<[1], [1], [0], [0], [0, 0, 1, 0], [], []>} : vector<12x16xf32>, vector<128x16xf32>, vector<12x128xf32> -> vector<12x128xf32>
    %3 = math.tanh %2 : vector<12x128xf32>
    %4 = arith.mulf %3, %3 : vector<12x128xf32>
    %cst_3 = arith.constant dense<0.000000e+00> : vector<128xf32>
    %5 = vector.multi_reduction <add>, %4, %cst_3 [0] : vector<12x128xf32> to vector<128xf32>
    %6 = vector.shape_cast %5 : vector<128xf32> to vector<1x128xf32>
    %7 = math.rsqrt %6 : vector<1x128xf32>
    %8 = vector.broadcast %7 : vector<1x128xf32> to vector<12x128xf32>
    %9 = arith.mulf %3, %8 : vector<12x128xf32>
    %c0_4 = arith.constant 0 : index
    %c0_5 = arith.constant 0 : index
    %10 = vector.load %arg3[%c0_4, %c0_5] : memref<6x12xf32, #tpu.memory_space<vmem>>, vector<6x12xf32>
    %cst_6 = arith.constant dense<0.000000e+00> : vector<6x128xf32>
    %11 = tpu.matmul %10, %9, %cst_6 {dimension_numbers = #tpu.dot_dimension_numbers<[1], [0], [0], [1], [0, 0, 1, 1], [], []>} : vector<6x12xf32>, vector<12x128xf32>, vector<6x128xf32> -> vector<6x128xf32>
    %12 = math.tanh %11 : vector<6x128xf32>
    %13 = arith.mulf %12, %12 : vector<6x128xf32>
    %cst_7 = arith.constant dense<0.000000e+00> : vector<128xf32>
    %14 = vector.multi_reduction <add>, %13, %cst_7 [0] : vector<6x128xf32> to vector<128xf32>
    %15 = vector.shape_cast %14 : vector<128xf32> to vector<1x128xf32>
    %16 = math.rsqrt %15 : vector<1x128xf32>
    %17 = vector.broadcast %16 : vector<1x128xf32> to vector<6x128xf32>
    %18 = arith.mulf %12, %17 : vector<6x128xf32>
    %c0_8 = arith.constant 0 : index
    %c0_9 = arith.constant 0 : index
    %19 = vector.load %arg4[%c0_8, %c0_9] : memref<3x6xf32, #tpu.memory_space<vmem>>, vector<3x6xf32>
    %cst_10 = arith.constant dense<0.000000e+00> : vector<3x128xf32>
    %20 = tpu.matmul %19, %18, %cst_10 {dimension_numbers = #tpu.dot_dimension_numbers<[1], [0], [0], [1], [0, 0, 1, 1], [], []>} : vector<3x6xf32>, vector<6x128xf32>, vector<3x128xf32> -> vector<3x128xf32>
    %21 = math.tanh %20 : vector<3x128xf32>
    %22 = arith.mulf %21, %21 : vector<3x128xf32>
    %cst_11 = arith.constant dense<0.000000e+00> : vector<128xf32>
    %23 = vector.multi_reduction <add>, %22, %cst_11 [0] : vector<3x128xf32> to vector<128xf32>
    %24 = vector.shape_cast %23 : vector<128xf32> to vector<1x128xf32>
    %25 = math.rsqrt %24 : vector<1x128xf32>
    %26 = vector.broadcast %25 : vector<1x128xf32> to vector<3x128xf32>
    %27 = arith.mulf %21, %26 : vector<3x128xf32>
    %c0_12 = arith.constant 0 : index
    %c0_13 = arith.constant 0 : index
    %28 = vector.load %arg5[%c0_12, %c0_13] : memref<3x128xf32, #tpu.memory_space<vmem>>, vector<3x128xf32>
    tpu.vector_store %arg5[%c0_12, %c0_13], %27 {strides = array<i32>} : memref<3x128xf32, #tpu.memory_space<vmem>>, vector<3x128xf32>,
    return
  }
  func.func @transform_0(%arg0: i32) -> (i32, i32) {
    %c0_i32 = arith.constant 0 : i32
    %c0_i32_0 = arith.constant 0 : i32
    return %arg0, %c0_i32 : i32, i32
  }
  func.func @transform_1(%arg0: i32) -> (i32, i32) {
    %c0_i32 = arith.constant 0 : i32
    %c0_i32_0 = arith.constant 0 : i32
    %c0_i32_1 = arith.constant 0 : i32
    return %c0_i32, %c0_i32_0 : i32, i32
  }
  func.func @transform_2(%arg0: i32) -> (i32, i32) {
    %c0_i32 = arith.constant 0 : i32
    %c0_i32_0 = arith.constant 0 : i32
    %c0_i32_1 = arith.constant 0 : i32
    return %c0_i32, %c0_i32_0 : i32, i32
  }
  func.func @transform_3(%arg0: i32) -> (i32, i32) {
    %c0_i32 = arith.constant 0 : i32
    %c0_i32_0 = arith.constant 0 : i32
    %c0_i32_1 = arith.constant 0 : i32
    return %c0_i32, %c0_i32_0 : i32, i32
  }
  func.func @transform_4(%arg0: i32) -> (i32, i32) {
    %c0_i32 = arith.constant 0 : i32
    %c0_i32_0 = arith.constant 0 : i32
    return %c0_i32, %arg0 : i32, i32
  }
}

</mosaic_0001>

<llo_original>
// kernel: tpu_custom_call.1
$region0: #{tpu_custom_call.1}
  #allocation0 [shape = 'u32[]', space=smem, size = 0x4, offset = 0x4, fixed_abs, tag = 'smem constant byte address 0x4 - core index']
  #allocation1 [shape = 'u32[144,128]{1,0:T(1,128)}', space=vmem, size = 0x12000, scoped, tag = 'internal scratch']
  %s0 = inlined_call_operand.vmem [shape: f32[32,16], index: 0, kind: input, shape index: {}]
  %s1 = inlined_call_operand.vmem [shape: f32[12,16], index: 1, kind: input, shape index: {}]
  %s2 = inlined_call_operand.vmem [shape: f32[6,12], index: 2, kind: input, shape index: {}]
  %s3 = inlined_call_operand.vmem [shape: f32[3,6], index: 3, kind: input, shape index: {}]
  %s4 = inlined_call_operand.hbm [shape: f32[3,32], index: 4, kind: output, shape index: {}]
  %s5 = sld [smem:[#allocation0]]
  $region26: #{tpu_custom_call.1} parent=0
    _
  %s7 = ssub.s32 1, %s5
  %s8 = scalar_select 0, %s7, %s5
  $region1: #{tpu_custom_call.1} parent=0
    #allocation2 [shape = 'u8[2048]{0}', space=vmem, size = 0x800, scoped, tag = 'output window, operand 0, single buffered']
    #allocation3 [shape = 's32[1]{0}', space=sflag, size = 0x4, scoped, tag = 'scoped memory for tpu_custom_call.1']
    %9 = vsyncpa [#allocation3], 0
    // Predicated region
    $region2: #{tpu_custom_call.1} parent=1 // pred_check
      _
    $region3: #{tpu_custom_call.1} parent=1 // pred_check_branch
      %11 = sbr.rel (0) target = $region5
    $region4: #{tpu_custom_call.1} parent=1 // pred_region
      _
    $region5: #{tpu_custom_call.1} parent=1 // pred_fallthru
      _
    // Predicated region
    $region6: #{tpu_custom_call.1} parent=1 // pred_check
      _
    $region7: #{tpu_custom_call.1} parent=1 // pred_check_branch
      %13 = sbr.rel (0) target = $region9
    $region8: #{tpu_custom_call.1} parent=1 // pred_region
      _
    $region9: #{tpu_custom_call.1} parent=1 // pred_fallthru
      _
    // Predicated region
    $region10: #{tpu_custom_call.1} parent=1 // pred_check
      _
    $region11: #{tpu_custom_call.1} parent=1 // pred_check_branch
      %15 = sbr.rel (0) target = $region13
    $region12: #{tpu_custom_call.1} parent=1 // pred_region
      _
    $region13: #{tpu_custom_call.1} parent=1 // pred_fallthru
      _
    // Predicated region
    $region14: #{tpu_custom_call.1} parent=1 // pred_check
      _
    $region15: #{tpu_custom_call.1} parent=1 // pred_check_branch
      %17 = sbr.rel (0) target = $region17
    $region16: #{tpu_custom_call.1} parent=1 // pred_region
      _
    $region17: #{tpu_custom_call.1} parent=1 // pred_fallthru
      _
    %v18 = vld [vmem:[%s1] sm:$0xff]
    %v19 = vld [vmem:[%s1 + $0x8] sm:$0xf]
    %v20 = vld [vmem:[%s0] sm:$0xff]
    %v21 = vld [vmem:[%s0 + $0x8] sm:$0xff]
    %v22 = vld [vmem:[%s0 + $0x10] sm:$0xff]
    %v23 = vld [vmem:[%s0 + $0x18] sm:$0xff]
    %v24 = vld [vmem:[%s0 + $0x20] sm:$0xff]
    %v25 = vld [vmem:[%s0 + $0x28] sm:$0xff]
    %v26 = vld [vmem:[%s0 + $0x30] sm:$0xff]
    %v27 = vld [vmem:[%s0 + $0x38] sm:$0xff]
    %v28 = vld [vmem:[%s0 + $0x40] sm:$0xff]
    %v29 = vld [vmem:[%s0 + $0x48] sm:$0xff]
    %v30 = vld [vmem:[%s0 + $0x50] sm:$0xff]
    %v31 = vld [vmem:[%s0 + $0x58] sm:$0xff]
    %v32 = vld [vmem:[%s0 + $0x60] sm:$0xff]
    %v33 = vld [vmem:[%s0 + $0x68] sm:$0xff]
    %v34 = vld [vmem:[%s0 + $0x70] sm:$0xff]
    %v35 = vld [vmem:[%s0 + $0x78] sm:$0xff]
    %vm36 = vcmask 130048
    %v38 = vsel %vm36, %v18, 0
    %v41 = vsel %vm36, %v19, 0
    %v44 = vsel %vm36, %v20, 0
    %v47 = vsel %vm36, %v21, 0
    %v50 = vsel %vm36, %v22, 0
    %v53 = vsel %vm36, %v23, 0
    %v56 = vsel %vm36, %v24, 0
    %v59 = vsel %vm36, %v25, 0
    %v62 = vsel %vm36, %v26, 0
    %v65 = vsel %vm36, %v27, 0
    %v68 = vsel %vm36, %v28, 0
    %v71 = vsel %vm36, %v29, 0
    %v74 = vsel %vm36, %v30, 0
    %v77 = vsel %vm36, %v31, 0
    %v80 = vsel %vm36, %v32, 0
    %v83 = vsel %vm36, %v33, 0
    %v86 = vsel %vm36, %v34, 0
    %v89 = vsel %vm36, %v35, 0
    %91 = vmatprep.subr.mxu0 0.0
    %92 = vmatpush1.xpose.msra.mxu0 %v44
    %93 = vmatprep.subr.mxu0 0.0
    %94 = vmatpush1.xpose.msra.mxu0 %v47
    %95 = vmatprep.subr.mxu0 0.0
    %96 = vmatpush1.xpose.msra.mxu0 %v50
    %97 = vmatprep.subr.mxu0 0.0
    %98 = vmatpush1.xpose.msra.mxu0 %v53
    %99 = vmatprep.subr.mxu0 0.0
    %100 = vmatpush1.xpose.msra.mxu0 %v56
    %101 = vmatprep.subr.mxu0 0.0
    %102 = vmatpush1.xpose.msra.mxu0 %v59
    %103 = vmatprep.subr.mxu0 0.0
    %104 = vmatpush1.xpose.msra.mxu0 %v62
    %105 = vmatprep.subr.mxu0 0.0
    %106 = vmatpush1.xpose.msra.mxu0 %v65
    %107 = vmatprep.subr.mxu0 0.0
    %108 = vmatpush1.xpose.msra.mxu0 %v68
    %109 = vmatprep.subr.mxu0 0.0
    %110 = vmatpush1.xpose.msra.mxu0 %v71
    %111 = vmatprep.subr.mxu0 0.0
    %112 = vmatpush1.xpose.msra.mxu0 %v74
    %113 = vmatprep.subr.mxu0 0.0
    %114 = vmatpush1.xpose.msra.mxu0 %v77
    %115 = vmatprep.subr.mxu0 0.0
    %116 = vmatpush1.xpose.msra.mxu0 %v80
    %117 = vmatprep.subr.mxu0 0.0
    %118 = vmatpush1.xpose.msra.mxu0 %v83
    %119 = vmatprep.subr.mxu0 0.0
    %120 = vmatpush1.xpose.msra.mxu0 %v86
    %121 = vmatprep.subr.mxu0 0.0
    %122 = vmatpush1.xpose.msra.mxu0 %v89
    %123 = vmatprep.subr.mxu0 0.0
    %124 = vmatpush1.xpose.msra.mxu0 0.0
    %125 = vmatprep.subr.mxu0 0.0
    %126 = vmatpush1.xpose.msra.mxu0 0.0
    %127 = vmatprep.subr.mxu0 0.0
    %128 = vmatpush1.xpose.msra.mxu0 0.0
    %129 = vmatprep.subr.mxu0 0.0
    %130 = vmatpush1.xpose.msra.mxu0 0.0
    %131 = vmatprep.subr.mxu0 0.0
    %132 = vmatpush1.xpose.msra.mxu0 0.0
    %133 = vmatprep.subr.mxu0 0.0
    %134 = vmatpush1.xpose.msra.mxu0 0.0
    %135 = vmatprep.subr.mxu0 0.0
    %136 = vmatpush1.xpose.msra.mxu0 0.0
    %137 = vmatprep.subr.mxu0 0.0
    %138 = vmatpush1.xpose.msra.mxu0 0.0
    %139 = vmatprep.subr.mxu0 0.0
    %140 = vmatpush1.xpose.msra.mxu0 0.0
    %141 = vmatprep.subr.mxu0 0.0
    %142 = vmatpush1.xpose.msra.mxu0 0.0
    %143 = vmatprep.subr.mxu0 0.0
    %144 = vmatpush1.xpose.msra.mxu0 0.0
    %145 = vmatprep.subr.mxu0 0.0
    %146 = vmatpush1.xpose.msra.mxu0 0.0
    %147 = vmatprep.subr.mxu0 0.0
    %148 = vmatpush1.xpose.msra.mxu0 0.0
    %149 = vmatprep.subr.mxu0 0.0
    %150 = vmatpush1.xpose.msra.mxu0 0.0
    %151 = vmatprep.subr.mxu0 0.0
    %152 = vmatpush1.xpose.msra.mxu0 0.0
    %153 = vmatprep.subr.mxu0 0.0
    %154 = vmatpush1.xpose.msra.mxu0 0.0
    %155 = vmatprep.mubr.f32.mxu0 0.0
    %156 = vmatmul.mubr.f32.gmra.mrb[0].mxu0 %v38
    %v157 = vpop.f32.mrb[0].mxu0
    %v158 = vadd.f32 0.0, %v157
    %v159 = vpop.f32.mrb[0].mxu0
    %160 = vmatprep.mubr.f32.mxu0 0.0
    %161 = vmatmul.mubr.f32.gmra.mrb[0].mxu0 %v41
    %v162 = vpop.f32.mrb[0].mxu0
    %v163 = vadd.f32 0.0, %v162
    %v164 = vpop.f32.mrb[0].mxu0
    %165 = vdwg.mxu0
    %v166 = vtanh.pop %v158
    %v167 = vtanh.pop %v163
    %v168 = vmul.f32 %v166, %v166
    %v169 = vmul.f32 %v167, %v167
    %vm170 = vcmask 1043456
    %v171 = vsel %vm170, %v169, 0.0
    %v172 = vadd.f32 %v168, %v171
    %v173 = vrot.slane %v172, 4
    %v174 = vadd.f32 %v172, %v173
    %v175 = vrot.slane %v174, 2
    %v176 = vadd.f32 %v174, %v175
    %v177 = vrot.slane %v176, 1
    %v178 = vadd.f32 %v176, %v177
    %v179 = vrsqrt.pop %v178
    %v180 = vmul.f32 %v166, %v179
    %v181 = vmul.f32 %v167, %v179
    %v182 = vld [vmem:[%s2] sm:$0x3f]
    %vm183 = vcmask 97280
    %v185 = vsel %vm183, %v182, 0
    %v188 = vsel %vm170, %v181, 0
    %190 = vmatprep.subr.mxu0 0.0
    %191 = vmatpush1.msra.mxu0 %v180
    %192 = vmatprep.subr.mxu0 0.0
    %193 = vmatpush1.msra.mxu0 %v188
    %194 = vmatprep.subr.mxu0 0.0
    %195 = vmatpush1.msra.mxu0 0.0
    %196 = vmatprep.subr.mxu0 0.0
    %197 = vmatpush1.msra.mxu0 0.0
    %198 = vmatprep.subr.mxu0 0.0
    %199 = vmatpush1.msra.mxu0 0.0
    %200 = vmatprep.subr.mxu0 0.0
    %201 = vmatpush1.msra.mxu0 0.0
    %202 = vmatprep.subr.mxu0 0.0
    %203 = vmatpush1.msra.mxu0 0.0
    %204 = vmatprep.subr.mxu0 0.0
    %205 = vmatpush1.msra.mxu0 0.0
    %206 = vmatprep.subr.mxu0 0.0
    %207 = vmatpush1.msra.mxu0 0.0
    %208 = vmatprep.subr.mxu0 0.0
    %209 = vmatpush1.msra.mxu0 0.0
    %210 = vmatprep.subr.mxu0 0.0
    %211 = vmatpush1.msra.mxu0 0.0
    %212 = vmatprep.subr.mxu0 0.0
    %213 = vmatpush1.msra.mxu0 0.0
    %214 = vmatprep.subr.mxu0 0.0
    %215 = vmatpush1.msra.mxu0 0.0
    %216 = vmatprep.subr.mxu0 0.0
    %217 = vmatpush1.msra.mxu0 0.0
    %218 = vmatprep.subr.mxu0 0.0
    %219 = vmatpush1.msra.mxu0 0.0
    %220 = vmatprep.subr.mxu0 0.0
    %221 = vmatpush1.msra.mxu0 0.0
    %222 = vmatprep.subr.mxu0 0.0
    %223 = vmatpush1.msra.mxu0 0.0
    %224 = vmatprep.subr.mxu0 0.0
    %225 = vmatpush1.msra.mxu0 0.0
    %226 = vmatprep.subr.mxu0 0.0
    %227 = vmatpush1.msra.mxu0 0.0
    %228 = vmatprep.subr.mxu0 0.0
    %229 = vmatpush1.msra.mxu0 0.0
    %230 = vmatprep.subr.mxu0 0.0
    %231 = vmatpush1.msra.mxu0 0.0
    %232 = vmatprep.subr.mxu0 0.0
    %233 = vmatpush1.msra.mxu0 0.0
    %234 = vmatprep.subr.mxu0 0.0
    %235 = vmatpush1.msra.mxu0 0.0
    %236 = vmatprep.subr.mxu0 0.0
    %237 = vmatpush1.msra.mxu0 0.0
    %238 = vmatprep.subr.mxu0 0.0
    %239 = vmatpush1.msra.mxu0 0.0
    %240 = vmatprep.subr.mxu0 0.0
    %241 = vmatpush1.msra.mxu0 0.0
    %242 = vmatprep.subr.mxu0 0.0
    %243 = vmatpush1.msra.mxu0 0.0
    %244 = vmatprep.subr.mxu0 0.0
    %245 = vmatpush1.msra.mxu0 0.0
    %246 = vmatprep.subr.mxu0 0.0
    %247 = vmatpush1.msra.mxu0 0.0
    %248 = vmatprep.subr.mxu0 0.0
    %249 = vmatpush1.msra.mxu0 0.0
    %250 = vmatprep.subr.mxu0 0.0
    %251 = vmatpush1.msra.mxu0 0.0
    %252 = vmatprep.subr.mxu0 0.0
    %253 = vmatpush1.msra.mxu0 0.0
    %254 = vmatprep.mubr.f32.mxu0 0.0
    %255 = vmatmul.mubr.f32.gmra.mrb[0].mxu0 %v185
    %v256 = vpop.f32.mrb[0].mxu0
    %v257 = vadd.f32 0.0, %v256
    %v258 = vpop.f32.mrb[0].mxu0
    %259 = vdwg.mxu0
    %v260 = vtanh.pop %v257
    %v261 = vmul.f32 %v260, %v260
    %vm262 = vcmask 1045504
    %v263 = vsel %vm262, %v261, 0.0
    %v264 = vrot.slane %v263, 4
    %v265 = vadd.f32 %v263, %v264
    %v266 = vrot.slane %v265, 2
    %v267 = vadd.f32 %v265, %v266
    %v268 = vrot.slane %v267, 1
    %v269 = vadd.f32 %v267, %v268
    %v270 = vrsqrt.pop %v269
    %v271 = vmul.f32 %v260, %v270
    %v272 = vld [vmem:[%s3] sm:$0x7]
    %vm273 = vcmask 48128
    %v275 = vsel %vm273, %v272, 0
    %v278 = vsel %vm262, %v271, 0
    %280 = vmatprep.subr.mxu0 0.0
    %281 = vmatpush1.msra.mxu0 %v278
    %282 = vmatprep.subr.mxu0 0.0
    %283 = vmatpush1.msra.mxu0 0.0
    %284 = vmatprep.subr.mxu0 0.0
    %285 = vmatpush1.msra.mxu0 0.0
    %286 = vmatprep.subr.mxu0 0.0
    %287 = vmatpush1.msra.mxu0 0.0
    %288 = vmatprep.subr.mxu0 0.0
    %289 = vmatpush1.msra.mxu0 0.0
    %290 = vmatprep.subr.mxu0 0.0
    %291 = vmatpush1.msra.mxu0 0.0
    %292 = vmatprep.subr.mxu0 0.0
    %293 = vmatpush1.msra.mxu0 0.0
    %294 = vmatprep.subr.mxu0 0.0
    %295 = vmatpush1.msra.mxu0 0.0
    %296 = vmatprep.subr.mxu0 0.0
    %297 = vmatpush1.msra.mxu0 0.0
    %298 = vmatprep.subr.mxu0 0.0
    %299 = vmatpush1.msra.mxu0 0.0
    %300 = vmatprep.subr.mxu0 0.0
    %301 = vmatpush1.msra.mxu0 0.0
    %302 = vmatprep.subr.mxu0 0.0
    %303 = vmatpush1.msra.mxu0 0.0
    %304 = vmatprep.subr.mxu0 0.0
    %305 = vmatpush1.msra.mxu0 0.0
    %306 = vmatprep.subr.mxu0 0.0
    %307 = vmatpush1.msra.mxu0 0.0
    %308 = vmatprep.subr.mxu0 0.0
    %309 = vmatpush1.msra.mxu0 0.0
    %310 = vmatprep.subr.mxu0 0.0
    %311 = vmatpush1.msra.mxu0 0.0
    %312 = vmatprep.subr.mxu0 0.0
    %313 = vmatpush1.msra.mxu0 0.0
    %314 = vmatprep.subr.mxu0 0.0
    %315 = vmatpush1.msra.mxu0 0.0
    %316 = vmatprep.subr.mxu0 0.0
    %317 = vmatpush1.msra.mxu0 0.0
    %318 = vmatprep.subr.mxu0 0.0
    %319 = vmatpush1.msra.mxu0 0.0
    %320 = vmatprep.subr.mxu0 0.0
    %321 = vmatpush1.msra.mxu0 0.0
    %322 = vmatprep.subr.mxu0 0.0
    %323 = vmatpush1.msra.mxu0 0.0
    %324 = vmatprep.subr.mxu0 0.0
    %325 = vmatpush1.msra.mxu0 0.0
    %326 = vmatprep.subr.mxu0 0.0
    %327 = vmatpush1.msra.mxu0 0.0
    %328 = vmatprep.subr.mxu0 0.0
    %329 = vmatpush1.msra.mxu0 0.0
    %330 = vmatprep.subr.mxu0 0.0
    %331 = vmatpush1.msra.mxu0 0.0
    %332 = vmatprep.subr.mxu0 0.0
    %333 = vmatpush1.msra.mxu0 0.0
    %334 = vmatprep.subr.mxu0 0.0
    %335 = vmatpush1.msra.mxu0 0.0
    %336 = vmatprep.subr.mxu0 0.0
    %337 = vmatpush1.msra.mxu0 0.0
    %338 = vmatprep.subr.mxu0 0.0
    %339 = vmatpush1.msra.mxu0 0.0
    %340 = vmatprep.subr.mxu0 0.0
    %341 = vmatpush1.msra.mxu0 0.0
    %342 = vmatprep.subr.mxu0 0.0
    %343 = vmatpush1.msra.mxu0 0.0
    %344 = vmatprep.mubr.f32.mxu0 0.0
    %345 = vmatmul.mubr.f32.gmra.mrb[0].mxu0 %v275
    %v346 = vpop.f32.mrb[0].mxu0
    %v347 = vadd.f32 0.0, %v346
    %v348 = vpop.f32.mrb[0].mxu0
    %349 = vdwg.mxu0
    %v350 = vtanh.pop %v347
    %v351 = vmul.f32 %v350, %v350
    %vm352 = vcmask 1042432
    %v353 = vsel %vm352, %v351, 0.0
    %v354 = vrot.slane %v353, 4
    %v355 = vadd.f32 %v353, %v354
    %v356 = vrot.slane %v355, 2
    %v357 = vadd.f32 %v355, %v356
    %v358 = vrot.slane %v357, 1
    %v359 = vadd.f32 %v357, %v358
    %v360 = vrsqrt.pop %v359
    %v361 = vmul.f32 %v350, %v360
    %362 = vst [vmem:[#allocation2] sm:$0x7] %v361
    // Predicated region
    $region18: #{tpu_custom_call.1} parent=1 // pred_check
      _
    $region19: #{tpu_custom_call.1} parent=1 // pred_check_branch
      %364 = sbr.rel (0) target = $region21
    $region20: #{tpu_custom_call.1} parent=1 // pred_region
      %s366 = ssub.s32 64, 64
      %367 = vsyncadd [#allocation3], %s366
      %s369 = sshll.u32 [#allocation2], 4
      %s370 = int_to_ptr.vmem [resolvable:$true] %s369
      %372 = dma.vmem_to_hbm [thread:$0]  %s370, 64, %s4, [#allocation3]
    $region21: #{tpu_custom_call.1} parent=1 // pred_fallthru
      _
    // Predicated region
    $region22: #{tpu_custom_call.1} parent=1 // pred_check
      _
    $region23: #{tpu_custom_call.1} parent=1 // pred_check_branch
      %374 = sbr.rel (0) target = $region25
    $region24: #{tpu_custom_call.1} parent=1 // pred_region
      %375 = dma.done [#allocation3], 64
    $region25: #{tpu_custom_call.1} parent=1 // pred_fallthru
      _
    %376 = vsyncpa [#allocation3], 1

</llo_original>
